<compile_context>
chip_gen: v6e
topology: v6e:2x2x1
jax: 0.10.0
libtpu: 0.0.40
codegen_flags: <defaults>
</compile_context>

<pallas_src>
import functools
import math

import jax
import jax.numpy as jnp
from jax.experimental import pallas as pl
from jax.experimental.pallas import tpu as pltpu


# ------------------------------ helpers -------------------------------------

def _round_up(x, m):
    return ((x + m - 1) // m) * m


def _sublane(dtype):
    """Minimum packed sublane tile for a dtype: f32->8, bf16->16, int8/fp8->32."""
    return max(8, 32 // jnp.dtype(dtype).itemsize)


def _largest_aligned_divisor(total, align, cap):
    """Largest d <= cap with d % align == 0 and total % d == 0 (total % align == 0)."""
    cap = max(align, min(cap, total))
    d = (cap // align) * align
    while d > align:
        if total % d == 0:
            return d
        d -= align
    return align


def _pick_tm(n_rows, sub, cap):
    """Row-tile size (multiple of `sub`).  Returns (tm, padded_row_count)."""
    rs = _round_up(n_rows, sub)
    if rs <= cap:
        return rs, rs
    # Prefer a divisor of rs: no extra row padding beyond sublane rounding.
    d = _largest_aligned_divisor(rs, sub, cap)
    if d >= 256:
        return d, rs
    tm = (cap // sub) * sub
    return tm, _round_up(n_rows, tm)


def _vmem_capacity_bytes():
    """Physical VMEM per TensorCore (per-generation); conservative fallback."""
    try:
        cap = int(pltpu.get_tpu_info().vmem_capacity_bytes)
        if cap >= (16 << 20):
            return cap
    except Exception:
        pass
    return 64 << 20  # v7x per-core size: the most restrictive generation.


# ------------------------------ Pallas kernel --------------------------------

def _qkv_matmul_kernel(*refs, compute_dtype, has_bias, split_at):
    """Tiled matmul (+ optional bias) with f32 VMEM accumulator.

    refs = (x_ref, w_ref, [b_ref,] out_ref(s)..., acc_ref)
    grid = (rows, cols, K_steps) with the reduction axis LAST.
    If split_at is not None, two outputs (q, kv) are written lane-densely.
    """
    if has_bias:
        x_ref, w_ref, b_ref = refs[0], refs[1], refs[2]
        rest = refs[3:]
    else:
        x_ref, w_ref = refs[0], refs[1]
        b_ref = None
        rest = refs[2:]
    acc_ref = rest[-1]
    out_refs = rest[:-1]

    k = pl.program_id(2)

    @pl.when(k == 0)
    def _init():
        acc_ref[...] = jnp.zeros_like(acc_ref)

    a = x_ref[...]
    w = w_ref[...]
    if compute_dtype is not None:
        # bf16 MXU operands (v5e/v6e/v7x native rate), f32 accumulation.
        a = a.astype(compute_dtype)
        w = w.astype(compute_dtype)
    acc_ref[...] += jnp.dot(a, w, preferred_element_type=jnp.float32)

    @pl.when(k == pl.num_programs(2) - 1)
    def _finalize():
        out = acc_ref[...]
        if b_ref is not None:
            out = out + b_ref[...].astype(jnp.float32)
        if split_at is None:
            o_ref = out_refs[0]
            o_ref[...] = out.astype(o_ref.dtype)
        else:
            q_ref, kv_ref = out_refs
            q_ref[...] = out[:, :split_at].astype(q_ref.dtype)
            kv_ref[...] = out[:, split_at:].astype(kv_ref.dtype)


# ------------------------------ parameter packing ----------------------------

def pack_qkv_params(w, b, dim, qk_dim):
    """Pad weight/bias ONCE (outside the jitted forward) to lane multiples."""
    K, M = w.shape
    assert K == dim and M == 2 * qk_dim + dim
    Mp = _round_up(M, 128)
    if Mp != M:
        w = jnp.pad(w, ((0, 0), (0, Mp - M)))
        if b is not None:
            b = jnp.pad(b, (0, Mp - M))
    return {'w': w, 'b': None if b is None else b.reshape(1, Mp)}


def init_qkv_linear(key, dim, qk_dim, bias=True, dtype=jnp.float32):
    """PyTorch nn.Linear-default init; returns raw (w, b) of logical shape."""
    out_features = 2 * qk_dim + dim
    kw, kb = jax.random.split(key)
    bound = 1.0 / math.sqrt(dim)
    w = jax.random.uniform(kw, (dim, out_features), dtype, -bound, bound)
    b = (jax.random.uniform(kb, (out_features,), dtype, -bound, bound)
         if bias else None)
    return w, b


# ------------------------------ forward --------------------------------------

def qkv_linear(params, x, *, dim, qk_dim, compute_dtype="auto",
               force_streaming=False, tile_caps=(512, 512, 1024)):
    """Forward pass of QKVLinear: returns (q, kv).

    params: from pack_qkv_params (weight pre-padded to [dim, round_up(M,128)]).
    x: [..., dim].  q: [..., qk_dim]; kv: [..., qk_dim + dim].
    compute_dtype: "auto" -> bf16 MXU operands for f32 inputs, None -> operand
    dtype (full precision), or an explicit dtype.  Accumulation is always f32.
    """
    w = params['w']                     # [dim, Mp]
    b = params.get('b')                 # [1, Mp] or None
    has_bias = b is not None

    M = 2 * qk_dim + dim
    K, Mp = w.shape
    assert K == dim and Mp == _round_up(M, 128)
    assert x.shape[-1] == dim

    lead = x.shape[:-1]
    x2 = x.reshape(-1, K)
    R = x2.shape[0]
    out_dtype = x.dtype

    if isinstance(compute_dtype, str) and compute_dtype == "auto":
        compute_dtype = jnp.bfloat16 if x.dtype == jnp.dtype(jnp.float32) else None

    xs = x2.dtype.itemsize
    ws = w.dtype.itemsize
    os_ = jnp.dtype(out_dtype).itemsize
    sub = _sublane(x2.dtype)
    tm_cap, tn_cap, tk_cap = tile_caps

    cap = _vmem_capacity_bytes()
    budget = cap // 2                   # ~half physical VMEM for the working set

    # ---------------- tile selection ----------------
    def resident_need(tm_):
        # Conservative: count the weight (and bias) as double-buffered too.
        return (2 * K * Mp * ws
                + 2 * tm_ * K * xs
                + 2 * tm_ * Mp * os_
                + tm_ * Mp * 4
                + (2 * Mp * ws if has_bias else 0))

    tm, Rp = _pick_tm(R, sub, tm_cap)
    resident = False
    if not force_streaming:
        cand_cap = tm_cap
        while cand_cap >= sub:
            tm_c, rp_c = _pick_tm(R, sub, cand_cap)
            if resident_need(tm_c) <= budget:
                resident, tm, Rp = True, tm_c, rp_c
                break
            if cand_cap == sub:
                break
            cand_cap = max(sub, cand_cap // 2)

    if resident:
        tk, tn = K, Mp
        need = resident_need(tm)
    else:
        tk = _largest_aligned_divisor(K, 128, tk_cap) if K % 128 == 0 else K
        tn = _largest_aligned_divisor(Mp, 128, tn_cap)

        def stream_need(tm_, tk_, tn_):
            return (2 * tm_ * tk_ * xs + 2 * tk_ * tn_ * ws
                    + 2 * tm_ * tn_ * os_ + tm_ * tn_ * 4
                    + (2 * tn_ * ws if has_bias else 0))

        while stream_need(tm, tk, tn) > budget:
            if tk > 128 and K % 128 == 0:
                tk = _largest_aligned_divisor(K, 128, tk // 2)
            elif tn > 128:
                tn = _largest_aligned_divisor(Mp, 128, tn // 2)
            elif tm > sub:
                tm, Rp = _pick_tm(R, sub, max(sub, tm // 2))
            else:
                break
        need = stream_need(tm, tk, tn)

    # Row padding only if R is not a multiple of the row tile.
    if Rp != R:
        x2 = jnp.pad(x2, ((0, Rp - R), (0, 0)))

    grid = (Rp // tm, Mp // tn, K // tk)

    # Lane-dense split outputs only when both halves are multiples of 128 and
    # the whole output width lives in one column block (resident path).
    split = resident and (qk_dim % 128 == 0) and ((qk_dim + dim) % 128 == 0)

    in_specs = [pl.BlockSpec((tm, tk), lambda i, j, k: (i, k)),
                pl.BlockSpec((tk, tn), lambda i, j, k: (k, j))]
    operands = [x2, w]
    if has_bias:
        in_specs.append(pl.BlockSpec((1, tn), lambda i, j, k: (0, j)))
        operands.append(b)

    if split:
        kv_dim = qk_dim + dim
        out_shape = (jax.ShapeDtypeStruct((Rp, qk_dim), out_dtype),
                     jax.ShapeDtypeStruct((Rp, kv_dim), out_dtype))
        out_specs = (pl.BlockSpec((tm, qk_dim), lambda i, j, k: (i, 0)),
                     pl.BlockSpec((tm, kv_dim), lambda i, j, k: (i, 0)))
        split_at = qk_dim
    else:
        out_shape = jax.ShapeDtypeStruct((Rp, Mp), out_dtype)
        out_specs = pl.BlockSpec((tm, tn), lambda i, j, k: (i, j))
        split_at = None

    kernel = functools.partial(_qkv_matmul_kernel,
                               compute_dtype=compute_dtype,
                               has_bias=has_bias,
                               split_at=split_at)

    if resident:
        dims = ("parallel", "arbitrary", "arbitrary")
        bytes_accessed = (Rp * K * xs + K * Mp * ws + Rp * Mp * os_
                          + (Mp * ws if has_bias else 0))
    else:
        ni, nj = Rp // tm, Mp // tn
        dims = ("parallel", "parallel", "arbitrary")
        bytes_accessed = (nj * Rp * K * xs + ni * K * Mp * ws + Rp * Mp * os_
                          + (ni * Mp * ws if has_bias else 0))

    vmem_limit = int(min(max(need + (8 << 20), 32 << 20), cap - (2 << 20)))

    out = pl.pallas_call(
        kernel,
        out_shape=out_shape,
        grid_spec=pltpu.PrefetchScalarGridSpec(
            num_scalar_prefetch=0,
            grid=grid,
            in_specs=in_specs,
            out_specs=out_specs,
            scratch_shapes=[pltpu.VMEM((tm, tn), jnp.float32)]),
        compiler_params=pltpu.CompilerParams(
            dimension_semantics=dims,
            vmem_limit_bytes=vmem_limit),
        cost_estimate=pl.CostEstimate(
            flops=2 * Rp * K * Mp,
            transcendentals=0,
            bytes_accessed=int(bytes_accessed)),
    )(*operands)

    if split:
        q2, kv2 = out
        if Rp != R:
            q2, kv2 = q2[:R], kv2[:R]
    else:
        y = out
        if Rp != R:
            y = y[:R]
        q2 = y[:, :qk_dim]
        kv2 = y[:, qk_dim:M]

    q = q2.reshape(*lead, qk_dim)
    kv = kv2.reshape(*lead, qk_dim + dim)
    return q, kv


# --------------------------------- main ---------------------------------------

if __name__ == "__main__":
    def reference(x, w, b, qk_dim):
        y = jnp.einsum('...k,km->...m', x, w,
                       precision=jax.lax.Precision.HIGHEST)
        if b is not None:
            y = y + b
        return y[..., :qk_dim], y[..., qk_dim:]

    def run_case(seed, B, N, dim, qk_dim, bias, compute_dtype, force_streaming,
                 tile_caps, atol, rtol):
        key = jax.random.PRNGKey(seed)
        kp, kx = jax.random.split(key)
        w, b = init_qkv_linear(kp, dim, qk_dim, bias=bias)
        x = jax.random.normal(kx, (B, N, dim), jnp.float32)

        params = pack_qkv_params(w, b, dim, qk_dim)
        fwd = jax.jit(functools.partial(
            qkv_linear, dim=dim, qk_dim=qk_dim, compute_dtype=compute_dtype,
            force_streaming=force_streaming, tile_caps=tile_caps))
        q, kv = jax.block_until_ready(fwd(params, x))

        assert q.shape == (B, N, qk_dim), q.shape
        assert kv.shape == (B, N, qk_dim + dim), kv.shape
        assert bool(jnp.all(jnp.isfinite(q))) and bool(jnp.all(jnp.isfinite(kv)))

        q_ref, kv_ref = reference(x, w, b, qk_dim)
        assert bool(jnp.allclose(q, q_ref, atol=atol, rtol=rtol)), (
            f"q mismatch (seed={seed}): max_abs_err="
            f"{float(jnp.max(jnp.abs(q - q_ref)))}")
        assert bool(jnp.allclose(kv, kv_ref, atol=atol, rtol=rtol)), (
            f"kv mismatch (seed={seed}): max_abs_err="
            f"{float(jnp.max(jnp.abs(kv - kv_ref)))}")

    # 1) Resident-weight path, fused output (+cheap slice), f32 MXU operands.
    run_case(0, B=2, N=64, dim=128, qk_dim=64, bias=True, compute_dtype=None,
             force_streaming=False, tile_caps=(512, 512, 1024),
             atol=1e-2, rtol=1e-2)
    # 2) Resident path with lane-dense split q/kv outputs, bf16 MXU operands.
    run_case(1, B=2, N=64, dim=128, qk_dim=128, bias=True, compute_dtype="auto",
             force_streaming=False, tile_caps=(512, 512, 1024),
             atol=6e-2, rtol=6e-2)
    # 3) Streaming (tiled K/N) fallback path, no bias, multi-step reduction.
    run_case(2, B=2, N=16, dim=256, qk_dim=64, bias=False, compute_dtype=None,
             force_streaming=True, tile_caps=(128, 128, 128),
             atol=2e-2, rtol=2e-2)
    # 4) Non-128-multiple dims: padded output columns + full-K block.
    run_case(3, B=2, N=24, dim=100, qk_dim=80, bias=True, compute_dtype=None,
             force_streaming=False, tile_caps=(512, 512, 1024),
             atol=2e-2, rtol=2e-2)

    print("KERNEL_OK")
</pallas_src>

<mosaic_0001>
module attributes {stable_mosaic.version = 11 : i64} {
  func.func @_qkv_matmul_kernel(%arg0: i32, %arg1: i32, %arg2: i32, %arg3: memref<128x128xf32, #tpu.memory_space<vmem>>, %arg4: memref<128x256xf32, #tpu.memory_space<vmem>>, %arg5: memref<1x256xf32, #tpu.memory_space<vmem>>, %arg6: memref<128x256xf32, #tpu.memory_space<vmem>>, %arg7: memref<128x256xf32, #tpu.memory_space<vmem>>) attributes {dimension_semantics = [#tpu.dimension_semantics<parallel>, #tpu.dimension_semantics<arbitrary>, #tpu.dimension_semantics<arbitrary>], iteration_bounds = array<i64: 1, 1, 1>, scalar_prefetch = 0 : i64, scratch_operands = 1 : i64, tpu.core_type = #tpu.core_type<tc>, window_params = [{transform_indices = @transform_0, window_bounds = array<i64: 128, 128>}, {transform_indices = @transform_1, window_bounds = array<i64: 128, 256>}, {transform_indices = @transform_2, window_bounds = array<i64: 1, 256>}, {transform_indices = @transform_3, window_bounds = array<i64: 128, 256>}]} {
    %c0_i32 = arith.constant 0 : i32
    %0 = arith.cmpi eq, %arg2, %c0_i32 : i32
    %1 = arith.extui %0 : i1 to i32
    %c0_i32_0 = arith.constant 0 : i32
    %2 = arith.cmpi ne, %1, %c0_i32_0 : i32
    scf.if %2 {
      %cst_10 = arith.constant 0.000000e+00 : f32
      %12 = vector.broadcast %cst_10 : f32 to vector<128x256xf32>
      %c0_11 = arith.constant 0 : index
      %c0_12 = arith.constant 0 : index
      %13 = vector.load %arg7[%c0_11, %c0_12] : memref<128x256xf32, #tpu.memory_space<vmem>>, vector<128x256xf32>
      tpu.vector_store %arg7[%c0_11, %c0_12], %12 {strides = array<i32>} : memref<128x256xf32, #tpu.memory_space<vmem>>, vector<128x256xf32>,
    } else {
    }
    %c0 = arith.constant 0 : index
    %c0_1 = arith.constant 0 : index
    %3 = vector.load %arg3[%c0, %c0_1] : memref<128x128xf32, #tpu.memory_space<vmem>>, vector<128x128xf32>
    %c0_2 = arith.constant 0 : index
    %c0_3 = arith.constant 0 : index
    %4 = vector.load %arg4[%c0_2, %c0_3] : memref<128x256xf32, #tpu.memory_space<vmem>>, vector<128x256xf32>
    %c0_4 = arith.constant 0 : index
    %c0_5 = arith.constant 0 : index
    %5 = vector.load %arg7[%c0_4, %c0_5] : memref<128x256xf32, #tpu.memory_space<vmem>>, vector<128x256xf32>
    %cst = arith.constant dense<0.000000e+00> : vector<128x256xf32>
    %6 = tpu.matmul %3, %4, %cst {dimension_numbers = #tpu.dot_dimension_numbers<[1], [0], [0], [1], [0, 0, 1, 1], [], []>} : vector<128x128xf32>, vector<128x256xf32>, vector<128x256xf32> -> vector<128x256xf32>
    %7 = arith.addf %5, %6 : vector<128x256xf32>
    %c0_6 = arith.constant 0 : index
    %c0_7 = arith.constant 0 : index
    %8 = vector.load %arg7[%c0_6, %c0_7] : memref<128x256xf32, #tpu.memory_space<vmem>>, vector<128x256xf32>
    tpu.vector_store %arg7[%c0_6, %c0_7], %7 {strides = array<i32>} : memref<128x256xf32, #tpu.memory_space<vmem>>, vector<128x256xf32>,
    %c0_i32_8 = arith.constant 0 : i32
    %9 = arith.cmpi eq, %arg2, %c0_i32_8 : i32
    %10 = arith.extui %9 : i1 to i32
    %c0_i32_9 = arith.constant 0 : i32
    %11 = arith.cmpi ne, %10, %c0_i32_9 : i32
    scf.if %11 {
      %c0_10 = arith.constant 0 : index
      %c0_11 = arith.constant 0 : index
      %12 = vector.load %arg7[%c0_10, %c0_11] : memref<128x256xf32, #tpu.memory_space<vmem>>, vector<128x256xf32>
      %c0_12 = arith.constant 0 : index
      %c0_13 = arith.constant 0 : index
      %13 = vector.load %arg5[%c0_12, %c0_13] : memref<1x256xf32, #tpu.memory_space<vmem>>, vector<1x256xf32>
      %14 = vector.broadcast %13 : vector<1x256xf32> to vector<128x256xf32>
      %15 = arith.addf %12, %14 : vector<128x256xf32>
      %c0_14 = arith.constant 0 : index
      %c0_15 = arith.constant 0 : index
      %16 = vector.load %arg6[%c0_14, %c0_15] : memref<128x256xf32, #tpu.memory_space<vmem>>, vector<128x256xf32>
      tpu.vector_store %arg6[%c0_14, %c0_15], %15 {strides = array<i32>} : memref<128x256xf32, #tpu.memory_space<vmem>>, vector<128x256xf32>,
    } else {
    }
    return
  }
  func.func @transform_0(%arg0: i32, %arg1: i32, %arg2: i32) -> (i32, i32) {
    %c0_i32 = arith.constant 0 : i32
    return %arg0, %arg2 : i32, i32
  }
  func.func @transform_1(%arg0: i32, %arg1: i32, %arg2: i32) -> (i32, i32) {
    %c0_i32 = arith.constant 0 : i32
    return %arg2, %arg1 : i32, i32
  }
  func.func @transform_2(%arg0: i32, %arg1: i32, %arg2: i32) -> (i32, i32) {
    %c0_i32 = arith.constant 0 : i32
    %c0_i32_0 = arith.constant 0 : i32
    return %c0_i32, %arg1 : i32, i32
  }
  func.func @transform_3(%arg0: i32, %arg1: i32, %arg2: i32) -> (i32, i32) {
    %c0_i32 = arith.constant 0 : i32
    return %arg0, %arg1 : i32, i32
  }
}

</mosaic_0001>

<llo_original>
// kernel: qkv_linear.1
$region0: #{qkv_linear.1}
  #allocation0 [shape = 'u32[]', space=smem, size = 0x4, offset = 0x4, fixed_abs, tag = 'smem constant byte address 0x4 - core index']
  #allocation1 [shape = 'u32[144,128]{1,0:T(1,128)}', space=vmem, size = 0x12000, scoped, tag = 'internal scratch']
  #allocation2 [shape = 'f32[128,256]{1,0:T(8,128)}', space=vmem, size = 0x20000, scoped, tag = 'scratch operand']
  %s0 = inlined_call_operand.hbm [shape: f32[128,128], index: 0, kind: input, shape index: {}]
  %s1 = inlined_call_operand.hbm [shape: f32[128,256], index: 1, kind: input, shape index: {}]
  %s2 = inlined_call_operand.hbm [shape: f32[1,256], index: 2, kind: input, shape index: {}]
  %s3 = inlined_call_operand.vmem [shape: f32[128,256], index: 3, kind: output, shape index: {}]
  %s4 = sld [smem:[#allocation0]]
  $region42: #{qkv_linear.1} parent=0
    _
  %s6 = ssub.s32 1, %s4
  %s7 = scalar_select 0, %s6, %s4
  $region1: #{qkv_linear.1} parent=0
    #allocation3 [shape = 'u8[65536]{0}', space=vmem, size = 0x10000, scoped, tag = 'input window, operand 0, single buffered']
    #allocation4 [shape = 's32[1]{0}', space=sflag, size = 0x4, scoped, tag = 'scoped memory for qkv_linear.1']
    #allocation5 [shape = 'u8[131072]{0}', space=vmem, size = 0x20000, scoped, tag = 'input window, operand 1, single buffered']
    #allocation6 [shape = 's32[1]{0}', space=sflag, size = 0x4, scoped, tag = 'scoped memory for qkv_linear.1']
    #allocation7 [shape = 'u8[1024]{0}', space=vmem, size = 0x400, scoped, tag = 'input window, operand 2, single buffered']
    %8 = vsyncpa [#allocation4], 0
    %9 = vsyncpa [#allocation6], 0
    // Predicated region
    $region2: #{qkv_linear.1} parent=1 // pred_check
      _
    $region3: #{qkv_linear.1} parent=1 // pred_check_branch
      %11 = sbr.rel (0) target = $region5
    $region4: #{qkv_linear.1} parent=1 // pred_region
      %s13 = ssub.s32 2048, 2048
      %14 = vsyncadd [#allocation4], %s13
      %s15 = sshll.u32 [#allocation3], 4
      %s16 = int_to_ptr.vmem [resolvable:$true] %s15
      %21 = dma.hbm_to_vmem [thread:$0]  %s0, 2048, %s16, [#allocation4], 128, 128, 8
    $region5: #{qkv_linear.1} parent=1 // pred_fallthru
      _
    // Predicated region
    $region6: #{qkv_linear.1} parent=1 // pred_check
      _
    $region7: #{qkv_linear.1} parent=1 // pred_check_branch
      %23 = sbr.rel (0) target = $region9
    $region8: #{qkv_linear.1} parent=1 // pred_region
      %s25 = ssub.s32 4096, 4096
      %26 = vsyncadd [#allocation6], %s25
      %s27 = sshll.u32 [#allocation5], 4
      %s28 = int_to_ptr.vmem [resolvable:$true] %s27
      %33 = dma.hbm_to_vmem [thread:$0]  %s1, 4096, %s28, [#allocation6], 256, 256, 16
    $region9: #{qkv_linear.1} parent=1 // pred_fallthru
      _
    // Predicated region
    $region10: #{qkv_linear.1} parent=1 // pred_check
      _
    $region11: #{qkv_linear.1} parent=1 // pred_check_branch
      %35 = sbr.rel (0) target = $region13
    $region12: #{qkv_linear.1} parent=1 // pred_region
      %s37 = ssub.s32 32, 32
      %38 = vsyncadd [#allocation6], %s37
      %s40 = sshll.u32 [#allocation7], 4
      %s41 = int_to_ptr.vmem [resolvable:$true] %s40
      %43 = dma.hbm_to_vmem [thread:$0]  %s2, 32, %s41, [#allocation6]
    $region13: #{qkv_linear.1} parent=1 // pred_fallthru
      _
    // Predicated region
    $region14: #{qkv_linear.1} parent=1 // pred_check
      _
    $region15: #{qkv_linear.1} parent=1 // pred_check_branch
      %45 = sbr.rel (0) target = $region17
    $region16: #{qkv_linear.1} parent=1 // pred_region
      %46 = dma.done [#allocation4], 2048
    $region17: #{qkv_linear.1} parent=1 // pred_fallthru
      _
    // Predicated region
    $region18: #{qkv_linear.1} parent=1 // pred_check
      _
    $region19: #{qkv_linear.1} parent=1 // pred_check_branch
      %48 = sbr.rel (0) target = $region21
    $region20: #{qkv_linear.1} parent=1 // pred_region
      %49 = dma.done [#allocation6], 4096
    $region21: #{qkv_linear.1} parent=1 // pred_fallthru
      _
    // Predicated region
    $region22: #{qkv_linear.1} parent=1 // pred_check
      _
    $region23: #{qkv_linear.1} parent=1 // pred_check_branch
      %51 = sbr.rel (0) target = $region25
    $region24: #{qkv_linear.1} parent=1 // pred_region
      %52 = dma.done [#allocation6], 32
    $region25: #{qkv_linear.1} parent=1 // pred_fallthru
      _
    %p53 = scmp.eq.s32.totalorder 0, 0
    // Predicated region
    $region26: #{qkv_linear.1} parent=1 // pred_check
      %p54 = pneg %p53
    $region27: #{qkv_linear.1} parent=1 // pred_check_branch
      %56 = sbr.rel (%p54) target = $region29
    $region28: #{qkv_linear.1} parent=1 // pred_region
      %57 = vst [vmem:[#allocation2] sm:$0xff] 0.0
      %58 = vst [vmem:[#allocation2 + $0x8] sm:$0xff] 0.0
      %59 = vst [vmem:[#allocation2 + $0x10] sm:$0xff] 0.0
      %60 = vst [vmem:[#allocation2 + $0x18] sm:$0xff] 0.0
      %61 = vst [vmem:[#allocation2 + $0x20] sm:$0xff] 0.0
      %62 = vst [vmem:[#allocation2 + $0x28] sm:$0xff] 0.0
      %63 = vst [vmem:[#allocation2 + $0x30] sm:$0xff] 0.0
      %64 = vst [vmem:[#allocation2 + $0x38] sm:$0xff] 0.0
      %65 = vst [vmem:[#allocation2 + $0x40] sm:$0xff] 0.0
      %66 = vst [vmem:[#allocation2 + $0x48] sm:$0xff] 0.0
      %67 = vst [vmem:[#allocation2 + $0x50] sm:$0xff] 0.0
      %68 = vst [vmem:[#allocation2 + $0x58] sm:$0xff] 0.0
      %69 = vst [vmem:[#allocation2 + $0x60] sm:$0xff] 0.0
      %70 = vst [vmem:[#allocation2 + $0x68] sm:$0xff] 0.0
      %71 = vst [vmem:[#allocation2 + $0x70] sm:$0xff] 0.0
      %72 = vst [vmem:[#allocation2 + $0x78] sm:$0xff] 0.0
      %73 = vst [vmem:[#allocation2 + $0x80] sm:$0xff] 0.0
      %74 = vst [vmem:[#allocation2 + $0x88] sm:$0xff] 0.0
      %75 = vst [vmem:[#allocation2 + $0x90] sm:$0xff] 0.0
      %76 = vst [vmem:[#allocation2 + $0x98] sm:$0xff] 0.0
      %77 = vst [vmem:[#allocation2 + $0xa0] sm:$0xff] 0.0
      %78 = vst [vmem:[#allocation2 + $0xa8] sm:$0xff] 0.0
      %79 = vst [vmem:[#allocation2 + $0xb0] sm:$0xff] 0.0
      %80 = vst [vmem:[#allocation2 + $0xb8] sm:$0xff] 0.0
      %81 = vst [vmem:[#allocation2 + $0xc0] sm:$0xff] 0.0
      %82 = vst [vmem:[#allocation2 + $0xc8] sm:$0xff] 0.0
      %83 = vst [vmem:[#allocation2 + $0xd0] sm:$0xff] 0.0
      %84 = vst [vmem:[#allocation2 + $0xd8] sm:$0xff] 0.0
      %85 = vst [vmem:[#allocation2 + $0xe0] sm:$0xff] 0.0
      %86 = vst [vmem:[#allocation2 + $0xe8] sm:$0xff] 0.0
      %87 = vst [vmem:[#allocation2 + $0xf0] sm:$0xff] 0.0
      %88 = vst [vmem:[#allocation2 + $0xf8] sm:$0xff] 0.0
    $region29: #{qkv_linear.1} parent=1 // pred_fallthru
      _
    %v89 = vld [vmem:[#allocation3] sm:$0xff]
    %v90 = vld [vmem:[#allocation3 + $0x8] sm:$0xff]
    %v91 = vld [vmem:[#allocation3 + $0x10] sm:$0xff]
    %v92 = vld [vmem:[#allocation3 + $0x18] sm:$0xff]
    %v93 = vld [vmem:[#allocation3 + $0x20] sm:$0xff]
    %v94 = vld [vmem:[#allocation3 + $0x28] sm:$0xff]
    %v95 = vld [vmem:[#allocation3 + $0x30] sm:$0xff]
    %v96 = vld [vmem:[#allocation3 + $0x38] sm:$0xff]
    %v97 = vld [vmem:[#allocation3 + $0x40] sm:$0xff]
    %v98 = vld [vmem:[#allocation3 + $0x48] sm:$0xff]
    %v99 = vld [vmem:[#allocation3 + $0x50] sm:$0xff]
    %v100 = vld [vmem:[#allocation3 + $0x58] sm:$0xff]
    %v101 = vld [vmem:[#allocation3 + $0x60] sm:$0xff]
    %v102 = vld [vmem:[#allocation3 + $0x68] sm:$0xff]
    %v103 = vld [vmem:[#allocation3 + $0x70] sm:$0xff]
    %v104 = vld [vmem:[#allocation3 + $0x78] sm:$0xff]
    %v105 = vld [vmem:[#allocation5] sm:$0xff]
    %v106 = vld [vmem:[#allocation5 + $0x8] sm:$0xff]
    %v107 = vld [vmem:[#allocation5 + $0x10] sm:$0xff]
    %v108 = vld [vmem:[#allocation5 + $0x18] sm:$0xff]
    %v109 = vld [vmem:[#allocation5 + $0x20] sm:$0xff]
    %v110 = vld [vmem:[#allocation5 + $0x28] sm:$0xff]
    %v111 = vld [vmem:[#allocation5 + $0x30] sm:$0xff]
    %v112 = vld [vmem:[#allocation5 + $0x38] sm:$0xff]
    %v113 = vld [vmem:[#allocation5 + $0x40] sm:$0xff]
    %v114 = vld [vmem:[#allocation5 + $0x48] sm:$0xff]
    %v115 = vld [vmem:[#allocation5 + $0x50] sm:$0xff]
    %v116 = vld [vmem:[#allocation5 + $0x58] sm:$0xff]
    %v117 = vld [vmem:[#allocation5 + $0x60] sm:$0xff]
    %v118 = vld [vmem:[#allocation5 + $0x68] sm:$0xff]
    %v119 = vld [vmem:[#allocation5 + $0x70] sm:$0xff]
    %v120 = vld [vmem:[#allocation5 + $0x78] sm:$0xff]
    %v121 = vld [vmem:[#allocation5 + $0x80] sm:$0xff]
    %v122 = vld [vmem:[#allocation5 + $0x88] sm:$0xff]
    %v123 = vld [vmem:[#allocation5 + $0x90] sm:$0xff]
    %v124 = vld [vmem:[#allocation5 + $0x98] sm:$0xff]
    %v125 = vld [vmem:[#allocation5 + $0xa0] sm:$0xff]
    %v126 = vld [vmem:[#allocation5 + $0xa8] sm:$0xff]
    %v127 = vld [vmem:[#allocation5 + $0xb0] sm:$0xff]
    %v128 = vld [vmem:[#allocation5 + $0xb8] sm:$0xff]
    %v129 = vld [vmem:[#allocation5 + $0xc0] sm:$0xff]
    %v130 = vld [vmem:[#allocation5 + $0xc8] sm:$0xff]
    %v131 = vld [vmem:[#allocation5 + $0xd0] sm:$0xff]
    %v132 = vld [vmem:[#allocation5 + $0xd8] sm:$0xff]
    %v133 = vld [vmem:[#allocation5 + $0xe0] sm:$0xff]
    %v134 = vld [vmem:[#allocation5 + $0xe8] sm:$0xff]
    %v135 = vld [vmem:[#allocation5 + $0xf0] sm:$0xff]
    %v136 = vld [vmem:[#allocation5 + $0xf8] sm:$0xff]
    %v137 = vld [vmem:[#allocation2] sm:$0xff]
    %v138 = vld [vmem:[#allocation2 + $0x8] sm:$0xff]
    %v139 = vld [vmem:[#allocation2 + $0x10] sm:$0xff]
    %v140 = vld [vmem:[#allocation2 + $0x18] sm:$0xff]
    %v141 = vld [vmem:[#allocation2 + $0x20] sm:$0xff]
    %v142 = vld [vmem:[#allocation2 + $0x28] sm:$0xff]
    %v143 = vld [vmem:[#allocation2 + $0x30] sm:$0xff]
    %v144 = vld [vmem:[#allocation2 + $0x38] sm:$0xff]
    %v145 = vld [vmem:[#allocation2 + $0x40] sm:$0xff]
    %v146 = vld [vmem:[#allocation2 + $0x48] sm:$0xff]
    %v147 = vld [vmem:[#allocation2 + $0x50] sm:$0xff]
    %v148 = vld [vmem:[#allocation2 + $0x58] sm:$0xff]
    %v149 = vld [vmem:[#allocation2 + $0x60] sm:$0xff]
    %v150 = vld [vmem:[#allocation2 + $0x68] sm:$0xff]
    %v151 = vld [vmem:[#allocation2 + $0x70] sm:$0xff]
    %v152 = vld [vmem:[#allocation2 + $0x78] sm:$0xff]
    %v153 = vld [vmem:[#allocation2 + $0x80] sm:$0xff]
    %v154 = vld [vmem:[#allocation2 + $0x88] sm:$0xff]
    %v155 = vld [vmem:[#allocation2 + $0x90] sm:$0xff]
    %v156 = vld [vmem:[#allocation2 + $0x98] sm:$0xff]
    %v157 = vld [vmem:[#allocation2 + $0xa0] sm:$0xff]
    %v158 = vld [vmem:[#allocation2 + $0xa8] sm:$0xff]
    %v159 = vld [vmem:[#allocation2 + $0xb0] sm:$0xff]
    %v160 = vld [vmem:[#allocation2 + $0xb8] sm:$0xff]
    %v161 = vld [vmem:[#allocation2 + $0xc0] sm:$0xff]
    %v162 = vld [vmem:[#allocation2 + $0xc8] sm:$0xff]
    %v163 = vld [vmem:[#allocation2 + $0xd0] sm:$0xff]
    %v164 = vld [vmem:[#allocation2 + $0xd8] sm:$0xff]
    %v165 = vld [vmem:[#allocation2 + $0xe0] sm:$0xff]
    %v166 = vld [vmem:[#allocation2 + $0xe8] sm:$0xff]
    %v167 = vld [vmem:[#allocation2 + $0xf0] sm:$0xff]
    %v168 = vld [vmem:[#allocation2 + $0xf8] sm:$0xff]
    %169 = vmatprep.subr.mxu0 %v136
    %170 = vmatpush1.msra.mxu0 %v135
    %171 = vmatprep.subr.mxu0 %v134
    %172 = vmatpush1.msra.mxu0 %v133
    %173 = vmatprep.subr.mxu0 %v132
    %174 = vmatpush1.msra.mxu0 %v131
    %175 = vmatprep.subr.mxu0 %v130
    %176 = vmatpush1.msra.mxu0 %v129
    %177 = vmatprep.subr.mxu0 %v128
    %178 = vmatpush1.msra.mxu0 %v127
    %179 = vmatprep.subr.mxu0 %v126
    %180 = vmatpush1.msra.mxu0 %v125
    %181 = vmatprep.subr.mxu0 %v124
    %182 = vmatpush1.msra.mxu0 %v123
    %183 = vmatprep.subr.mxu0 %v122
    %184 = vmatpush1.msra.mxu0 %v121
    %185 = vmatprep.subr.mxu0 %v120
    %186 = vmatpush1.msra.mxu0 %v119
    %187 = vmatprep.subr.mxu0 %v118
    %188 = vmatpush1.msra.mxu0 %v117
    %189 = vmatprep.subr.mxu0 %v116
    %190 = vmatpush1.msra.mxu0 %v115
    %191 = vmatprep.subr.mxu0 %v114
    %192 = vmatpush1.msra.mxu0 %v113
    %193 = vmatprep.subr.mxu0 %v112
    %194 = vmatpush1.msra.mxu0 %v111
    %195 = vmatprep.subr.mxu0 %v110
    %196 = vmatpush1.msra.mxu0 %v109
    %197 = vmatprep.subr.mxu0 %v108
    %198 = vmatpush1.msra.mxu0 %v107
    %199 = vmatprep.subr.mxu0 %v106
    %200 = vmatpush1.msra.mxu0 %v105
    %201 = vmatprep.subr.mxu0 0.0
    %202 = vmatpush2.msra.mxu0 0.0
    %203 = vmatprep.subr.mxu0 0.0
    %204 = vmatpush2.msra.mxu0 0.0
    %205 = vmatprep.subr.mxu0 0.0
    %206 = vmatpush2.msra.mxu0 0.0
    %207 = vmatprep.subr.mxu0 0.0
    %208 = vmatpush2.msra.mxu0 0.0
    %209 = vmatprep.subr.mxu0 0.0
    %210 = vmatpush2.msra.mxu0 0.0
    %211 = vmatprep.subr.mxu0 0.0
    %212 = vmatpush2.msra.mxu0 0.0
    %213 = vmatprep.subr.mxu0 0.0
    %214 = vmatpush2.msra.mxu0 0.0
    %215 = vmatprep.subr.mxu0 0.0
    %216 = vmatpush2.msra.mxu0 0.0
    %217 = vmatprep.subr.mxu0 0.0
    %218 = vmatpush2.msra.mxu0 0.0
    %219 = vmatprep.subr.mxu0 0.0
    %220 = vmatpush2.msra.mxu0 0.0
    %221 = vmatprep.subr.mxu0 0.0
    %222 = vmatpush2.msra.mxu0 0.0
    %223 = vmatprep.subr.mxu0 0.0
    %224 = vmatpush2.msra.mxu0 0.0
    %225 = vmatprep.subr.mxu0 0.0
    %226 = vmatpush2.msra.mxu0 0.0
    %227 = vmatprep.subr.mxu0 0.0
    %228 = vmatpush2.msra.mxu0 0.0
    %229 = vmatprep.subr.mxu0 0.0
    %230 = vmatpush2.msra.mxu0 0.0
    %231 = vmatprep.subr.mxu0 0.0
    %232 = vmatpush2.msra.mxu0 0.0
    %233 = vmatprep.mubr.f32.mxu0 0.0
    %234 = vmatmul.mubr.f32.gmra.mxu0 %v89
    %v235 = vpop.f32.mrf.mxu0
    %v236 = vadd.f32 0.0, %v235
    %v237 = vpop.f32.mrf.mxu0
    %v238 = vadd.f32 0.0, %v237
    %239 = vmatprep.mubr.f32.mxu0 0.0
    %240 = vmatmul.mubr.f32.gmra.mxu0 %v90
    %v241 = vpop.f32.mrf.mxu0
    %v242 = vadd.f32 0.0, %v241
    %v243 = vpop.f32.mrf.mxu0
    %v244 = vadd.f32 0.0, %v243
    %245 = vmatprep.mubr.f32.mxu0 0.0
    %246 = vmatmul.mubr.f32.gmra.mxu0 %v91
    %v247 = vpop.f32.mrf.mxu0
    %v248 = vadd.f32 0.0, %v247
    %v249 = vpop.f32.mrf.mxu0
    %v250 = vadd.f32 0.0, %v249
    %251 = vmatprep.mubr.f32.mxu0 0.0
    %252 = vmatmul.mubr.f32.gmra.mxu0 %v92
    %v253 = vpop.f32.mrf.mxu0
    %v254 = vadd.f32 0.0, %v253
    %v255 = vpop.f32.mrf.mxu0
    %v256 = vadd.f32 0.0, %v255
    %257 = vmatprep.mubr.f32.mxu0 0.0
    %258 = vmatmul.mubr.f32.gmra.mxu0 %v93
    %v259 = vpop.f32.mrf.mxu0
    %v260 = vadd.f32 0.0, %v259
    %v261 = vpop.f32.mrf.mxu0
    %v262 = vadd.f32 0.0, %v261
    %263 = vmatprep.mubr.f32.mxu0 0.0
    %264 = vmatmul.mubr.f32.gmra.mxu0 %v94
    %v265 = vpop.f32.mrf.mxu0
    %v266 = vadd.f32 0.0, %v265
    %v267 = vpop.f32.mrf.mxu0
    %v268 = vadd.f32 0.0, %v267
    %269 = vmatprep.mubr.f32.mxu0 0.0
    %270 = vmatmul.mubr.f32.gmra.mxu0 %v95
    %v271 = vpop.f32.mrf.mxu0
    %v272 = vadd.f32 0.0, %v271
    %v273 = vpop.f32.mrf.mxu0
    %v274 = vadd.f32 0.0, %v273
    %275 = vmatprep.mubr.f32.mxu0 0.0
    %276 = vmatmul.mubr.f32.gmra.mxu0 %v96
    %v277 = vpop.f32.mrf.mxu0
    %v278 = vadd.f32 0.0, %v277
    %v279 = vpop.f32.mrf.mxu0
    %v280 = vadd.f32 0.0, %v279
    %281 = vmatprep.mubr.f32.mxu0 0.0
    %282 = vmatmul.mubr.f32.gmra.mxu0 %v97
    %v283 = vpop.f32.mrf.mxu0
    %v284 = vadd.f32 0.0, %v283
    %v285 = vpop.f32.mrf.mxu0
    %v286 = vadd.f32 0.0, %v285
    %287 = vmatprep.mubr.f32.mxu0 0.0
    %288 = vmatmul.mubr.f32.gmra.mxu0 %v98
    %v289 = vpop.f32.mrf.mxu0
    %v290 = vadd.f32 0.0, %v289
    %v291 = vpop.f32.mrf.mxu0
    %v292 = vadd.f32 0.0, %v291
    %293 = vmatprep.mubr.f32.mxu0 0.0
    %294 = vmatmul.mubr.f32.gmra.mxu0 %v99
    %v295 = vpop.f32.mrf.mxu0
    %v296 = vadd.f32 0.0, %v295
    %v297 = vpop.f32.mrf.mxu0
    %v298 = vadd.f32 0.0, %v297
    %299 = vmatprep.mubr.f32.mxu0 0.0
    %300 = vmatmul.mubr.f32.gmra.mxu0 %v100
    %v301 = vpop.f32.mrf.mxu0
    %v302 = vadd.f32 0.0, %v301
    %v303 = vpop.f32.mrf.mxu0
    %v304 = vadd.f32 0.0, %v303
    %305 = vmatprep.mubr.f32.mxu0 0.0
    %306 = vmatmul.mubr.f32.gmra.mxu0 %v101
    %v307 = vpop.f32.mrf.mxu0
    %v308 = vadd.f32 0.0, %v307
    %v309 = vpop.f32.mrf.mxu0
    %v310 = vadd.f32 0.0, %v309
    %311 = vmatprep.mubr.f32.mxu0 0.0
    %312 = vmatmul.mubr.f32.gmra.mxu0 %v102
    %v313 = vpop.f32.mrf.mxu0
    %v314 = vadd.f32 0.0, %v313
    %v315 = vpop.f32.mrf.mxu0
    %v316 = vadd.f32 0.0, %v315
    %317 = vmatprep.mubr.f32.mxu0 0.0
    %318 = vmatmul.mubr.f32.gmra.mxu0 %v103
    %v319 = vpop.f32.mrf.mxu0
    %v320 = vadd.f32 0.0, %v319
    %v321 = vpop.f32.mrf.mxu0
    %v322 = vadd.f32 0.0, %v321
    %323 = vmatprep.mubr.f32.mxu0 0.0
    %324 = vmatmul.mubr.f32.gmra.mxu0 %v104
    %v325 = vpop.f32.mrf.mxu0
    %v326 = vadd.f32 0.0, %v325
    %v327 = vpop.f32.mrf.mxu0
    %v328 = vadd.f32 0.0, %v327
    %329 = vdwg.mxu0
    %v330 = vadd.f32 %v137, %v236
    %v331 = vadd.f32 %v138, %v238
    %v332 = vadd.f32 %v139, %v242
    %v333 = vadd.f32 %v140, %v244
    %v334 = vadd.f32 %v141, %v248
    %v335 = vadd.f32 %v142, %v250
    %v336 = vadd.f32 %v143, %v254
    %v337 = vadd.f32 %v144, %v256
    %v338 = vadd.f32 %v145, %v260
    %v339 = vadd.f32 %v146, %v262
    %v340 = vadd.f32 %v147, %v266
    %v341 = vadd.f32 %v148, %v268
    %v342 = vadd.f32 %v149, %v272
    %v343 = vadd.f32 %v150, %v274
    %v344 = vadd.f32 %v151, %v278
    %v345 = vadd.f32 %v152, %v280
    %v346 = vadd.f32 %v153, %v284
    %v347 = vadd.f32 %v154, %v286
    %v348 = vadd.f32 %v155, %v290
    %v349 = vadd.f32 %v156, %v292
    %v350 = vadd.f32 %v157, %v296
    %v351 = vadd.f32 %v158, %v298
    %v352 = vadd.f32 %v159, %v302
    %v353 = vadd.f32 %v160, %v304
    %v354 = vadd.f32 %v161, %v308
    %v355 = vadd.f32 %v162, %v310
    %v356 = vadd.f32 %v163, %v314
    %v357 = vadd.f32 %v164, %v316
    %v358 = vadd.f32 %v165, %v320
    %v359 = vadd.f32 %v166, %v322
    %v360 = vadd.f32 %v167, %v326
    %v361 = vadd.f32 %v168, %v328
    %362 = vst [vmem:[#allocation2] sm:$0xff] %v330
    %363 = vst [vmem:[#allocation2 + $0x8] sm:$0xff] %v331
    %364 = vst [vmem:[#allocation2 + $0x10] sm:$0xff] %v332
    %365 = vst [vmem:[#allocation2 + $0x18] sm:$0xff] %v333
    %366 = vst [vmem:[#allocation2 + $0x20] sm:$0xff] %v334
    %367 = vst [vmem:[#allocation2 + $0x28] sm:$0xff] %v335
    %368 = vst [vmem:[#allocation2 + $0x30] sm:$0xff] %v336
    %369 = vst [vmem:[#allocation2 + $0x38] sm:$0xff] %v337
    %370 = vst [vmem:[#allocation2 + $0x40] sm:$0xff] %v338
    %371 = vst [vmem:[#allocation2 + $0x48] sm:$0xff] %v339
    %372 = vst [vmem:[#allocation2 + $0x50] sm:$0xff] %v340
    %373 = vst [vmem:[#allocation2 + $0x58] sm:$0xff] %v341
    %374 = vst [vmem:[#allocation2 + $0x60] sm:$0xff] %v342
    %375 = vst [vmem:[#allocation2 + $0x68] sm:$0xff] %v343
    %376 = vst [vmem:[#allocation2 + $0x70] sm:$0xff] %v344
    %377 = vst [vmem:[#allocation2 + $0x78] sm:$0xff] %v345
    %378 = vst [vmem:[#allocation2 + $0x80] sm:$0xff] %v346
    %379 = vst [vmem:[#allocation2 + $0x88] sm:$0xff] %v347
    %380 = vst [vmem:[#allocation2 + $0x90] sm:$0xff] %v348
    %381 = vst [vmem:[#allocation2 + $0x98] sm:$0xff] %v349
    %382 = vst [vmem:[#allocation2 + $0xa0] sm:$0xff] %v350
    %383 = vst [vmem:[#allocation2 + $0xa8] sm:$0xff] %v351
    %384 = vst [vmem:[#allocation2 + $0xb0] sm:$0xff] %v352
    %385 = vst [vmem:[#allocation2 + $0xb8] sm:$0xff] %v353
    %386 = vst [vmem:[#allocation2 + $0xc0] sm:$0xff] %v354
    %387 = vst [vmem:[#allocation2 + $0xc8] sm:$0xff] %v355
    %388 = vst [vmem:[#allocation2 + $0xd0] sm:$0xff] %v356
    %389 = vst [vmem:[#allocation2 + $0xd8] sm:$0xff] %v357
    %390 = vst [vmem:[#allocation2 + $0xe0] sm:$0xff] %v358
    %391 = vst [vmem:[#allocation2 + $0xe8] sm:$0xff] %v359
    %392 = vst [vmem:[#allocation2 + $0xf0] sm:$0xff] %v360
    %393 = vst [vmem:[#allocation2 + $0xf8] sm:$0xff] %v361
    // Predicated region
    $region30: #{qkv_linear.1} parent=1 // pred_check
      %p394 = pneg %p53
    $region31: #{qkv_linear.1} parent=1 // pred_check_branch
      %396 = sbr.rel (%p394) target = $region33
    $region32: #{qkv_linear.1} parent=1 // pred_region
      %v397 = vld [vmem:[#allocation2] sm:$0xff]
      %v398 = vld [vmem:[#allocation2 + $0x8] sm:$0xff]
      %v399 = vld [vmem:[#allocation2 + $0x10] sm:$0xff]
      %v400 = vld [vmem:[#allocation2 + $0x18] sm:$0xff]
      %v401 = vld [vmem:[#allocation2 + $0x20] sm:$0xff]
      %v402 = vld [vmem:[#allocation2 + $0x28] sm:$0xff]
      %v403 = vld [vmem:[#allocation2 + $0x30] sm:$0xff]
      %v404 = vld [vmem:[#allocation2 + $0x38] sm:$0xff]
      %v405 = vld [vmem:[#allocation2 + $0x40] sm:$0xff]
      %v406 = vld [vmem:[#allocation2 + $0x48] sm:$0xff]
      %v407 = vld [vmem:[#allocation2 + $0x50] sm:$0xff]
      %v408 = vld [vmem:[#allocation2 + $0x58] sm:$0xff]
      %v409 = vld [vmem:[#allocation2 + $0x60] sm:$0xff]
      %v410 = vld [vmem:[#allocation2 + $0x68] sm:$0xff]
      %v411 = vld [vmem:[#allocation2 + $0x70] sm:$0xff]
      %v412 = vld [vmem:[#allocation2 + $0x78] sm:$0xff]
      %v413 = vld [vmem:[#allocation2 + $0x80] sm:$0xff]
      %v414 = vld [vmem:[#allocation2 + $0x88] sm:$0xff]
      %v415 = vld [vmem:[#allocation2 + $0x90] sm:$0xff]
      %v416 = vld [vmem:[#allocation2 + $0x98] sm:$0xff]
      %v417 = vld [vmem:[#allocation2 + $0xa0] sm:$0xff]
      %v418 = vld [vmem:[#allocation2 + $0xa8] sm:$0xff]
      %v419 = vld [vmem:[#allocation2 + $0xb0] sm:$0xff]
      %v420 = vld [vmem:[#allocation2 + $0xb8] sm:$0xff]
      %v421 = vld [vmem:[#allocation2 + $0xc0] sm:$0xff]
      %v422 = vld [vmem:[#allocation2 + $0xc8] sm:$0xff]
      %v423 = vld [vmem:[#allocation2 + $0xd0] sm:$0xff]
      %v424 = vld [vmem:[#allocation2 + $0xd8] sm:$0xff]
      %v425 = vld [vmem:[#allocation2 + $0xe0] sm:$0xff]
      %v426 = vld [vmem:[#allocation2 + $0xe8] sm:$0xff]
      %v427 = vld [vmem:[#allocation2 + $0xf0] sm:$0xff]
      %v428 = vld [vmem:[#allocation2 + $0xf8] sm:$0xff]
      %v429 = vld [vmem:[#allocation7] sm:$0x3]
      %v431 = vlaneseq
      %v432 = vshrl.u32 %v431, 7
      %v433 = vsub.s32 0, %v432
      %v434 = vrot.slane %v429, %v433
      %v435 = vlaneseq
      %v436 = vshrl.u32 %v435, 7
      %v437 = vsub.s32 1, %v436
      %v438 = vrot.slane %v429, %v437
      %v441 = vadd.f32 %v397, %v434
      %v442 = vadd.f32 %v398, %v438
      %v443 = vadd.f32 %v399, %v434
      %v444 = vadd.f32 %v400, %v438
      %v445 = vadd.f32 %v401, %v434
      %v446 = vadd.f32 %v402, %v438
      %v447 = vadd.f32 %v403, %v434
      %v448 = vadd.f32 %v404, %v438
      %v449 = vadd.f32 %v405, %v434
      %v450 = vadd.f32 %v406, %v438
      %v451 = vadd.f32 %v407, %v434
      %v452 = vadd.f32 %v408, %v438
      %v453 = vadd.f32 %v409, %v434
      %v454 = vadd.f32 %v410, %v438
      %v455 = vadd.f32 %v411, %v434
      %v456 = vadd.f32 %v412, %v438
      %v457 = vadd.f32 %v413, %v434
      %v458 = vadd.f32 %v414, %v438
      %v459 = vadd.f32 %v415, %v434
      %v460 = vadd.f32 %v416, %v438
      %v461 = vadd.f32 %v417, %v434
      %v462 = vadd.f32 %v418, %v438
      %v463 = vadd.f32 %v419, %v434
      %v464 = vadd.f32 %v420, %v438
      %v465 = vadd.f32 %v421, %v434
      %v466 = vadd.f32 %v422, %v438
      %v467 = vadd.f32 %v423, %v434
      %v468 = vadd.f32 %v424, %v438
      %v469 = vadd.f32 %v425, %v434
      %v470 = vadd.f32 %v426, %v438
      %v471 = vadd.f32 %v427, %v434
      %v472 = vadd.f32 %v428, %v438
      %473 = vst [vmem:[%s3] sm:$0xff] %v441
      %474 = vst [vmem:[%s3 + $0x8] sm:$0xff] %v442
      %475 = vst [vmem:[%s3 + $0x10] sm:$0xff] %v443
      %476 = vst [vmem:[%s3 + $0x18] sm:$0xff] %v444
      %477 = vst [vmem:[%s3 + $0x20] sm:$0xff] %v445
      %478 = vst [vmem:[%s3 + $0x28] sm:$0xff] %v446
      %479 = vst [vmem:[%s3 + $0x30] sm:$0xff] %v447
      %480 = vst [vmem:[%s3 + $0x38] sm:$0xff] %v448
      %481 = vst [vmem:[%s3 + $0x40] sm:$0xff] %v449
      %482 = vst [vmem:[%s3 + $0x48] sm:$0xff] %v450
      %483 = vst [vmem:[%s3 + $0x50] sm:$0xff] %v451
      %484 = vst [vmem:[%s3 + $0x58] sm:$0xff] %v452
      %485 = vst [vmem:[%s3 + $0x60] sm:$0xff] %v453
      %486 = vst [vmem:[%s3 + $0x68] sm:$0xff] %v454
      %487 = vst [vmem:[%s3 + $0x70] sm:$0xff] %v455
      %488 = vst [vmem:[%s3 + $0x78] sm:$0xff] %v456
      %489 = vst [vmem:[%s3 + $0x80] sm:$0xff] %v457
      %490 = vst [vmem:[%s3 + $0x88] sm:$0xff] %v458
      %491 = vst [vmem:[%s3 + $0x90] sm:$0xff] %v459
      %492 = vst [vmem:[%s3 + $0x98] sm:$0xff] %v460
      %493 = vst [vmem:[%s3 + $0xa0] sm:$0xff] %v461
      %494 = vst [vmem:[%s3 + $0xa8] sm:$0xff] %v462
      %495 = vst [vmem:[%s3 + $0xb0] sm:$0xff] %v463
      %496 = vst [vmem:[%s3 + $0xb8] sm:$0xff] %v464
      %497 = vst [vmem:[%s3 + $0xc0] sm:$0xff] %v465
      %498 = vst [vmem:[%s3 + $0xc8] sm:$0xff] %v466
      %499 = vst [vmem:[%s3 + $0xd0] sm:$0xff] %v467
      %500 = vst [vmem:[%s3 + $0xd8] sm:$0xff] %v468
      %501 = vst [vmem:[%s3 + $0xe0] sm:$0xff] %v469
      %502 = vst [vmem:[%s3 + $0xe8] sm:$0xff] %v470
      %503 = vst [vmem:[%s3 + $0xf0] sm:$0xff] %v471
      %504 = vst [vmem:[%s3 + $0xf8] sm:$0xff] %v472
    $region33: #{qkv_linear.1} parent=1 // pred_fallthru
      _
    // Predicated region
    $region34: #{qkv_linear.1} parent=1 // pred_check
      _
    $region35: #{qkv_linear.1} parent=1 // pred_check_branch
      %506 = sbr.rel (0) target = $region37
    $region36: #{qkv_linear.1} parent=1 // pred_region
      _
    $region37: #{qkv_linear.1} parent=1 // pred_fallthru
      _
    // Predicated region
    $region38: #{qkv_linear.1} parent=1 // pred_check
      _
    $region39: #{qkv_linear.1} parent=1 // pred_check_branch
      %508 = sbr.rel (0) target = $region41
    $region40: #{qkv_linear.1} parent=1 // pred_region
      _
    $region41: #{qkv_linear.1} parent=1 // pred_fallthru
      _
    %509 = vsyncpa [#allocation4], 1
    %510 = vsyncpa [#allocation6], 1

</llo_original>
